<compile_context>
chip_gen: v5e
topology: v5e:2x2
jax: 0.10.0
libtpu: 0.0.40
codegen_flags: <defaults>
</compile_context>

<pallas_src>
import jax
import jax.numpy as jnp
from jax import lax
from jax.experimental import pallas as pl
from jax.experimental.pallas import tpu as pltpu  # noqa: F401  (TPU-specific params if scaled up)

BN_EPS = 1e-5
LANE = 128


def _round_up(n, m):
    return ((n + m - 1) // m) * m


def generator_kernel(x_ref, w1_ref, gamma_ref, beta_ref, w2_ref, b2_ref, o_ref):
    mm_dtype = w1_ref.dtype  # f32 (exact) or bf16 (v6e/v7x fast path)

    # ---- Linear 1: [B, Din] @ [Din, H_p]  (bias dropped: cancelled by BN mean) ----
    x = x_ref[...].astype(mm_dtype)
    h = jnp.dot(x, w1_ref[...], preferred_element_type=jnp.float32)  # f32 accum

    # ---- BatchNorm1d (training mode), centered two-pass stats (all f32) ----
    inv_b = 1.0 / h.shape[0]                                    # static
    mean = jnp.sum(h, axis=0, keepdims=True) * inv_b            # (1, H_p)
    centered = h - mean
    var = jnp.sum(centered * centered, axis=0, keepdims=True) * inv_b
    scale = gamma_ref[...] * lax.rsqrt(var + BN_EPS)            # (1, H_p), EUP rsqrt

    # ---- BN apply + ReLU: (h - mean) * scale + beta, clamped at 0 (f32 VPU) ----
    h_relu = jnp.maximum(centered * scale + beta_ref[...], 0.0)

    # ---- Linear 2: [B, H_p] @ [H_p, Dout] + b2 ----
    out = jnp.dot(h_relu.astype(mm_dtype), w2_ref[...],
                  preferred_element_type=jnp.float32) + b2_ref[...]
    o_ref[...] = out.astype(o_ref.dtype)


def prep_params(params, matmul_dtype=jnp.float32):
    """One-time prep: pad the hidden (N) dim to a lane multiple and optionally
    cast the matmul weights to bf16.  Done once at init, NOT per call.

    Padded hidden columns are inert: zero w1 columns -> h==0 there, gamma
    padded with 0 -> scale==0, beta padded with 0 -> h_relu==0, and they hit
    zero rows of w2.  b1 is dropped (training-mode BN cancels it exactly)."""
    hid_d = params["w1"].shape[1]
    hid_p = _round_up(hid_d, LANE)
    dh = hid_p - hid_d
    return {
        "w1": jnp.pad(params["w1"], ((0, 0), (0, dh))).astype(matmul_dtype),
        "gamma": jnp.pad(params["gamma"], ((0, 0), (0, dh))),           # pad 0 -> inert
        "beta": jnp.pad(params["beta"], ((0, 0), (0, dh))),
        "w2": jnp.pad(params["w2"], ((0, dh), (0, 0))).astype(matmul_dtype),
        "b2": params["b2"],
    }


@jax.jit
def generator_forward(x, prepped):
    """x: [B, lat_v_D] float32. prepped: output of prep_params (pre-padded)."""
    B, lat_d = x.shape
    hid_p = prepped["w1"].shape[1]

    full = lambda shape: pl.BlockSpec(shape, lambda: tuple(0 for _ in shape))

    flops = 4 * B * lat_d * hid_p  # two matmuls, 2*M*N*K each
    bytes_accessed = (
        x.size * x.dtype.itemsize
        + sum(int(a.size) * a.dtype.itemsize for a in prepped.values())
        + B * lat_d * x.dtype.itemsize
    )

    out = pl.pallas_call(
        generator_kernel,
        out_shape=jax.ShapeDtypeStruct((B, lat_d), x.dtype),
        grid=(),
        in_specs=[
            full((B, lat_d)),       # x (unpadded; full-array block)
            full((lat_d, hid_p)),   # w1 (hidden dim pre-padded)
            full((1, hid_p)),       # gamma
            full((1, hid_p)),       # beta
            full((hid_p, lat_d)),   # w2
            full((1, lat_d)),       # b2
        ],
        out_specs=full((B, lat_d)),
        cost_estimate=pl.CostEstimate(
            flops=flops, transcendentals=hid_p, bytes_accessed=bytes_accessed),
    )(x, prepped["w1"], prepped["gamma"], prepped["beta"], prepped["w2"], prepped["b2"])

    # TODO(synk): if B/H grow beyond one VMEM tile, tile a grid over the hidden
    # dim as an "arbitrary" reduction axis for Linear 2 (full batch per tile so
    # BN batch stats stay exact), add a "parallel" non-batch axis for v7x's 2nd
    # TensorCore, and re-derive tile sizes against v7x's 64 MiB VMEM (set
    # pltpu.CompilerParams(vmem_limit_bytes=...) with 2x double-buffering).
    return out


def init_params(key, lat_v_D, gen_hid_D):
    """Deterministic init mimicking PyTorch's default uniform(-1/sqrt(fan_in), +)."""
    k1, k2, k3, k4 = jax.random.split(key, 4)
    bound1 = 1.0 / jnp.sqrt(lat_v_D)
    bound2 = 1.0 / jnp.sqrt(gen_hid_D)
    return {
        # stored as [in, out]
        "w1": jax.random.uniform(k1, (lat_v_D, gen_hid_D), jnp.float32, -bound1, bound1),
        "b1": jax.random.uniform(k2, (1, gen_hid_D), jnp.float32, -bound1, bound1),
        "gamma": jnp.ones((1, gen_hid_D), jnp.float32),   # BatchNorm1d weight
        "beta": jnp.zeros((1, gen_hid_D), jnp.float32),   # BatchNorm1d bias
        "w2": jax.random.uniform(k3, (gen_hid_D, lat_v_D), jnp.float32, -bound2, bound2),
        "b2": jax.random.uniform(k4, (1, lat_v_D), jnp.float32, -bound2, bound2),
    }


def reference_forward(x, params):
    """Pure-JAX reference matching PyTorch training-mode forward (includes b1).
    Note: b1 is mathematically cancelled by the BN batch-mean subtraction, which
    is why the kernel omits it (valid only for training-mode/batch statistics)."""
    h = x @ params["w1"] + params["b1"]
    mean = jnp.mean(h, axis=0, keepdims=True)
    var = jnp.mean((h - mean) ** 2, axis=0, keepdims=True)
    h = (h - mean) / jnp.sqrt(var + BN_EPS)
    h = h * params["gamma"] + params["beta"]
    h = jnp.maximum(h, 0.0)
    return h @ params["w2"] + params["b2"]


if __name__ == "__main__":
    B, lat_v_D, gen_hid_D = 8, 32, 64

    key = jax.random.PRNGKey(0)
    k_x, k_p = jax.random.split(key)
    x = jax.random.normal(k_x, (B, lat_v_D), dtype=jnp.float32)
    params = init_params(k_p, lat_v_D, gen_hid_D)
    ref = reference_forward(x, params)

    # --- f32 matmul operands (default): bit-faithful to the PyTorch module ---
    prepped_f32 = prep_params(params, matmul_dtype=jnp.float32)
    out = jax.block_until_ready(generator_forward(x, prepped_f32))
    assert out.shape == (B, lat_v_D), out.shape
    assert jnp.allclose(out, ref, atol=1e-4, rtol=1e-4), "f32 mismatch vs reference"

    # --- bf16 matmul operands (v6e/v7x fast path): f32 accum, f32 BN/ReLU ---
    prepped_bf16 = prep_params(params, matmul_dtype=jnp.bfloat16)
    out_bf16 = jax.block_until_ready(generator_forward(x, prepped_bf16))
    assert out_bf16.shape == (B, lat_v_D), out_bf16.shape
    assert jnp.allclose(out_bf16, ref, atol=6e-2, rtol=6e-2), "bf16 mismatch vs reference"

    print("KERNEL_OK")
</pallas_src>

<mosaic_0001>
module attributes {stable_mosaic.version = 11 : i64} {
  func.func @generator_kernel(%arg0: memref<8x32xf32, #tpu.memory_space<vmem>>, %arg1: memref<32x128xf32, #tpu.memory_space<vmem>>, %arg2: memref<1x128xf32, #tpu.memory_space<vmem>>, %arg3: memref<1x128xf32, #tpu.memory_space<vmem>>, %arg4: memref<128x32xf32, #tpu.memory_space<vmem>>, %arg5: memref<1x32xf32, #tpu.memory_space<vmem>>, %arg6: memref<8x32xf32, #tpu.memory_space<vmem>>) attributes {dimension_semantics = [], scalar_prefetch = 0 : i64, scratch_operands = 0 : i64, tpu.core_type = #tpu.core_type<tc>} {
    %c0 = arith.constant 0 : index
    %c0_0 = arith.constant 0 : index
    %0 = vector.load %arg0[%c0, %c0_0] : memref<8x32xf32, #tpu.memory_space<vmem>>, vector<8x32xf32>
    %c0_1 = arith.constant 0 : index
    %c0_2 = arith.constant 0 : index
    %1 = vector.load %arg1[%c0_1, %c0_2] : memref<32x128xf32, #tpu.memory_space<vmem>>, vector<32x128xf32>
    %cst = arith.constant dense<0.000000e+00> : vector<8x128xf32>
    %2 = tpu.matmul %0, %1, %cst {dimension_numbers = #tpu.dot_dimension_numbers<[1], [0], [0], [1], [0, 0, 1, 1], [], []>} : vector<8x32xf32>, vector<32x128xf32>, vector<8x128xf32> -> vector<8x128xf32>
    %cst_3 = arith.constant dense<0.000000e+00> : vector<128xf32>
    %3 = vector.multi_reduction <add>, %2, %cst_3 [0] : vector<8x128xf32> to vector<128xf32>
    %4 = vector.shape_cast %3 : vector<128xf32> to vector<1x128xf32>
    %cst_4 = arith.constant 1.250000e-01 : f32
    %5 = vector.broadcast %cst_4 : f32 to vector<1x128xf32>
    %6 = arith.mulf %4, %5 : vector<1x128xf32>
    %7 = vector.broadcast %6 : vector<1x128xf32> to vector<8x128xf32>
    %8 = arith.subf %2, %7 : vector<8x128xf32>
    %9 = arith.mulf %8, %8 : vector<8x128xf32>
    %cst_5 = arith.constant dense<0.000000e+00> : vector<128xf32>
    %10 = vector.multi_reduction <add>, %9, %cst_5 [0] : vector<8x128xf32> to vector<128xf32>
    %11 = vector.shape_cast %10 : vector<128xf32> to vector<1x128xf32>
    %cst_6 = arith.constant 1.250000e-01 : f32
    %12 = vector.broadcast %cst_6 : f32 to vector<1x128xf32>
    %13 = arith.mulf %11, %12 : vector<1x128xf32>
    %c0_7 = arith.constant 0 : index
    %c0_8 = arith.constant 0 : index
    %14 = vector.load %arg2[%c0_7, %c0_8] : memref<1x128xf32, #tpu.memory_space<vmem>>, vector<1x128xf32>
    %cst_9 = arith.constant 9.99999974E-6 : f32
    %15 = vector.broadcast %cst_9 : f32 to vector<1x128xf32>
    %16 = arith.addf %13, %15 : vector<1x128xf32>
    %17 = math.rsqrt %16 : vector<1x128xf32>
    %18 = arith.mulf %14, %17 : vector<1x128xf32>
    %19 = vector.broadcast %18 : vector<1x128xf32> to vector<8x128xf32>
    %20 = arith.mulf %8, %19 : vector<8x128xf32>
    %c0_10 = arith.constant 0 : index
    %c0_11 = arith.constant 0 : index
    %21 = vector.load %arg3[%c0_10, %c0_11] : memref<1x128xf32, #tpu.memory_space<vmem>>, vector<1x128xf32>
    %22 = vector.broadcast %21 : vector<1x128xf32> to vector<8x128xf32>
    %23 = arith.addf %20, %22 : vector<8x128xf32>
    %cst_12 = arith.constant 0.000000e+00 : f32
    %24 = vector.broadcast %cst_12 : f32 to vector<8x128xf32>
    %25 = arith.maximumf %23, %24 : vector<8x128xf32>
    %c0_13 = arith.constant 0 : index
    %c0_14 = arith.constant 0 : index
    %26 = vector.load %arg4[%c0_13, %c0_14] : memref<128x32xf32, #tpu.memory_space<vmem>>, vector<128x32xf32>
    %cst_15 = arith.constant dense<0.000000e+00> : vector<8x32xf32>
    %27 = tpu.matmul %25, %26, %cst_15 {dimension_numbers = #tpu.dot_dimension_numbers<[1], [0], [0], [1], [0, 0, 1, 1], [], []>} : vector<8x128xf32>, vector<128x32xf32>, vector<8x32xf32> -> vector<8x32xf32>
    %c0_16 = arith.constant 0 : index
    %c0_17 = arith.constant 0 : index
    %28 = vector.load %arg5[%c0_16, %c0_17] : memref<1x32xf32, #tpu.memory_space<vmem>>, vector<1x32xf32>
    %29 = vector.broadcast %28 : vector<1x32xf32> to vector<8x32xf32>
    %30 = arith.addf %27, %29 : vector<8x32xf32>
    %c0_18 = arith.constant 0 : index
    %c0_19 = arith.constant 0 : index
    %31 = vector.load %arg6[%c0_18, %c0_19] : memref<8x32xf32, #tpu.memory_space<vmem>>, vector<8x32xf32>
    tpu.vector_store %arg6[%c0_18, %c0_19], %30 {strides = array<i32>} : memref<8x32xf32, #tpu.memory_space<vmem>>, vector<8x32xf32>,
    return
  }
}

</mosaic_0001>

<llo_original>
// kernel: generator_forward.1
$region0: #{generator_forward.1}
  #allocation0 [shape = 'u32[]', space=smem, size = 0x4, offset = 0x4, fixed_abs, tag = 'smem constant byte address 0x4 - core index']
  #allocation1 [shape = 'u32[72,128]{1,0:T(1,128)}', space=vmem, size = 0x9000, scoped, tag = 'internal scratch']
  %s0 = inlined_call_operand.vmem [shape: f32[8,32], index: 0, kind: input, shape index: {}]
  %s1 = inlined_call_operand.vmem [shape: f32[32,128], index: 1, kind: input, shape index: {}]
  %s2 = inlined_call_operand.vmem [shape: f32[1,128], index: 2, kind: input, shape index: {}]
  %s3 = inlined_call_operand.vmem [shape: f32[1,128], index: 3, kind: input, shape index: {}]
  %s4 = inlined_call_operand.vmem [shape: f32[128,32], index: 4, kind: input, shape index: {}]
  %s5 = inlined_call_operand.vmem [shape: f32[1,32], index: 5, kind: input, shape index: {}]
  %s6 = inlined_call_operand.hbm [shape: f32[8,32], index: 6, kind: output, shape index: {}]
  %s7 = sld [smem:[#allocation0]]
  $region34: #{generator_forward.1} parent=0
    _
  %s9 = ssub.s32 1, %s7
  %s10 = scalar_select 0, %s9, %s7
  $region1: #{generator_forward.1} parent=0
    #allocation2 [shape = 'u8[4096]{0}', space=vmem, size = 0x1000, scoped, tag = 'output window, operand 0, single buffered']
    #allocation3 [shape = 's32[1]{0}', space=sflag, size = 0x4, scoped, tag = 'scoped memory for generator_forward.1']
    %11 = vsyncpa [#allocation3], 0
    // Predicated region
    $region2: #{generator_forward.1} parent=1 // pred_check
      _
    $region3: #{generator_forward.1} parent=1 // pred_check_branch
      %13 = sbr.rel (0) target = $region5
    $region4: #{generator_forward.1} parent=1 // pred_region
      _
    $region5: #{generator_forward.1} parent=1 // pred_fallthru
      _
    // Predicated region
    $region6: #{generator_forward.1} parent=1 // pred_check
      _
    $region7: #{generator_forward.1} parent=1 // pred_check_branch
      %15 = sbr.rel (0) target = $region9
    $region8: #{generator_forward.1} parent=1 // pred_region
      _
    $region9: #{generator_forward.1} parent=1 // pred_fallthru
      _
    // Predicated region
    $region10: #{generator_forward.1} parent=1 // pred_check
      _
    $region11: #{generator_forward.1} parent=1 // pred_check_branch
      %17 = sbr.rel (0) target = $region13
    $region12: #{generator_forward.1} parent=1 // pred_region
      _
    $region13: #{generator_forward.1} parent=1 // pred_fallthru
      _
    // Predicated region
    $region14: #{generator_forward.1} parent=1 // pred_check
      _
    $region15: #{generator_forward.1} parent=1 // pred_check_branch
      %19 = sbr.rel (0) target = $region17
    $region16: #{generator_forward.1} parent=1 // pred_region
      _
    $region17: #{generator_forward.1} parent=1 // pred_fallthru
      _
    // Predicated region
    $region18: #{generator_forward.1} parent=1 // pred_check
      _
    $region19: #{generator_forward.1} parent=1 // pred_check_branch
      %21 = sbr.rel (0) target = $region21
    $region20: #{generator_forward.1} parent=1 // pred_region
      _
    $region21: #{generator_forward.1} parent=1 // pred_fallthru
      _
    // Predicated region
    $region22: #{generator_forward.1} parent=1 // pred_check
      _
    $region23: #{generator_forward.1} parent=1 // pred_check_branch
      %23 = sbr.rel (0) target = $region25
    $region24: #{generator_forward.1} parent=1 // pred_region
      _
    $region25: #{generator_forward.1} parent=1 // pred_fallthru
      _
    %v24 = vld [vmem:[%s0] sm:$0xff]
    %v25 = vld [vmem:[%s1] sm:$0xff]
    %v26 = vld [vmem:[%s1 + $0x8] sm:$0xff]
    %v27 = vld [vmem:[%s1 + $0x10] sm:$0xff]
    %v28 = vld [vmem:[%s1 + $0x18] sm:$0xff]
    %vm29 = vcmask 261120
    %v31 = vsel %vm29, %v24, 0
    %33 = vmatpush.msra.mxu0 0.0
    %34 = vmatpush.msra.mxu0 0.0
    %35 = vmatpush.msra.mxu0 0.0
    %36 = vmatpush.msra.mxu0 0.0
    %37 = vmatpush.msra.mxu0 0.0
    %38 = vmatpush.msra.mxu0 0.0
    %39 = vmatpush.msra.mxu0 0.0
    %40 = vmatpush.msra.mxu0 0.0
    %41 = vmatpush.msra.mxu0 0.0
    %42 = vmatpush.msra.mxu0 0.0
    %43 = vmatpush.msra.mxu0 0.0
    %44 = vmatpush.msra.mxu0 0.0
    %45 = vmatpush.msra.mxu0 %v28
    %46 = vmatpush.msra.mxu0 %v27
    %47 = vmatpush.msra.mxu0 %v26
    %48 = vmatpush.msra.mxu0 %v25
    %49 = vmatmul.f32.gmra.mxu0 %v31
    %v50 = vpop.f32.mrf.mxu0
    %v51 = vadd.f32 0.0, %v50
    %52 = vdwg.mxu0
    %v53 = vrot.slane %v51, 4
    %v54 = vadd.f32 %v51, %v53
    %v55 = vrot.slane %v54, 2
    %v56 = vadd.f32 %v54, %v55
    %v57 = vrot.slane %v56, 1
    %v58 = vadd.f32 %v56, %v57
    %v59 = vmul.f32 %v58, 0.125
    %v60 = vsub.f32 %v51, %v59
    %v61 = vmul.f32 %v60, %v60
    %v62 = vrot.slane %v61, 4
    %v63 = vadd.f32 %v61, %v62
    %v64 = vrot.slane %v63, 2
    %v65 = vadd.f32 %v63, %v64
    %v66 = vrot.slane %v65, 1
    %v67 = vadd.f32 %v65, %v66
    %v68 = vmul.f32 %v67, 0.125
    %v69 = vld [vmem:[%s2] sm:$0x1]
    %v70 = vadd.f32 %v68, 1e-05
    %v71 = vrsqrt.pop %v70
    %v72 = vmul.f32 %v71, %v70
    %v73 = vmul.f32 %v72, %v71
    %v74 = vmul.f32 0.5, %v73
    %v75 = vsub.f32 1.5, %v74
    %v76 = vmul.f32 %v71, %v75
    %vm77 = vweird.f32 %v70
    %vm78 = vweird.f32 %v71
    %vm79 = vmor %vm77, %vm78
    %v80 = vsel %vm79, %v71, %v76
    %v81 = vmul.f32 %v69, %v80
    %v83 = vperm.slane %v81, 0
    %v85 = vmul.f32 %v60, %v83
    %v86 = vld [vmem:[%s3] sm:$0x1]
    %v88 = vperm.slane %v86, 0
    %v90 = vadd.f32 %v85, %v88
    %v91 = vmax.f32 %v90, 0.0
    %v92 = vld [vmem:[%s4] sm:$0xff]
    %v93 = vld [vmem:[%s4 + $0x8] sm:$0xff]
    %v94 = vld [vmem:[%s4 + $0x10] sm:$0xff]
    %v95 = vld [vmem:[%s4 + $0x18] sm:$0xff]
    %v96 = vld [vmem:[%s4 + $0x20] sm:$0xff]
    %v97 = vld [vmem:[%s4 + $0x28] sm:$0xff]
    %v98 = vld [vmem:[%s4 + $0x30] sm:$0xff]
    %v99 = vld [vmem:[%s4 + $0x38] sm:$0xff]
    %v100 = vld [vmem:[%s4 + $0x40] sm:$0xff]
    %v101 = vld [vmem:[%s4 + $0x48] sm:$0xff]
    %v102 = vld [vmem:[%s4 + $0x50] sm:$0xff]
    %v103 = vld [vmem:[%s4 + $0x58] sm:$0xff]
    %v104 = vld [vmem:[%s4 + $0x60] sm:$0xff]
    %v105 = vld [vmem:[%s4 + $0x68] sm:$0xff]
    %v106 = vld [vmem:[%s4 + $0x70] sm:$0xff]
    %v107 = vld [vmem:[%s4 + $0x78] sm:$0xff]
    %v108 = vld [vmem:[%s5] sm:$0x1]
    %v110 = vperm.slane %v108, 0
    %112 = vmatpush.msra.mxu0 %v107
    %113 = vmatpush.msra.mxu0 %v106
    %114 = vmatpush.msra.mxu0 %v105
    %115 = vmatpush.msra.mxu0 %v104
    %116 = vmatpush.msra.mxu0 %v103
    %117 = vmatpush.msra.mxu0 %v102
    %118 = vmatpush.msra.mxu0 %v101
    %119 = vmatpush.msra.mxu0 %v100
    %120 = vmatpush.msra.mxu0 %v99
    %121 = vmatpush.msra.mxu0 %v98
    %122 = vmatpush.msra.mxu0 %v97
    %123 = vmatpush.msra.mxu0 %v96
    %124 = vmatpush.msra.mxu0 %v95
    %125 = vmatpush.msra.mxu0 %v94
    %126 = vmatpush.msra.mxu0 %v93
    %127 = vmatpush.msra.mxu0 %v92
    %128 = vmatmul.f32.gmra.mxu0 %v91
    %v129 = vpop.f32.mrf.mxu0
    %v130 = vadd.f32 %v110, %v129
    %131 = vdwg.mxu0
    %132 = vst.msk [vmem:[#allocation2] sm:$0xff] %vm29, %v130
    // Predicated region
    $region26: #{generator_forward.1} parent=1 // pred_check
      _
    $region27: #{generator_forward.1} parent=1 // pred_check_branch
      %134 = sbr.rel (0) target = $region29
    $region28: #{generator_forward.1} parent=1 // pred_region
      %136 = vsyncadd [#allocation3], 0
      %s138 = sshll.u32 [#allocation2], 4
      %s139 = int_to_ptr.vmem [resolvable:$true] %s138
      %s140 = sshll.u32 %s6, 4
      %s141 = int_to_ptr.hbm [resolvable:$true] %s140
      %143 = dma.vmem_to_hbm [thread:$0]  %s139, 128, %s141, [#allocation3]
    $region29: #{generator_forward.1} parent=1 // pred_fallthru
      _
    // Predicated region
    $region30: #{generator_forward.1} parent=1 // pred_check
      _
    $region31: #{generator_forward.1} parent=1 // pred_check_branch
      %145 = sbr.rel (0) target = $region33
    $region32: #{generator_forward.1} parent=1 // pred_region
      %147 = dma.done [#allocation3], 128
    $region33: #{generator_forward.1} parent=1 // pred_fallthru
      _
    %148 = vsyncpa [#allocation3], 1

</llo_original>
